<compile_context>
chip_gen: v6e
topology: v6e:2x2x1
jax: 0.10.0
libtpu: 0.0.40
codegen_flags: <defaults>
</compile_context>

<pallas_src>
import functools
import math

import jax
import jax.numpy as jnp
from jax.experimental import pallas as pl
from jax.experimental.pallas import tpu as pltpu


def _round_up(x, m):
    return ((x + m - 1) // m) * m


# ---------------------------------------------------------------------------
# TDNN.special_convolution
# ---------------------------------------------------------------------------
def _tdnn_kernel(x_ref, w_ref, b_ref, o_ref, *scratch,
                 rel, bb, tm, tn, d, fold, gather, relu):
    """One (batch-block, out-tile, time-tile) of the TDNN.

    x_ref : (BB, window, D)     element-indexed halo window (bf16/f32)
            (BB, 1, window, D)  gathered-window fallback
    w_ref : (K*D, TN) if fold else (K, D, TN)              (bf16/f32)
    b_ref : (1, TN)                                        (f32)
    o_ref : (BB, TM, TN)
    scratch: (BB*TM, TN) f32 VMEM accumulator (only when not fold)
    """
    if gather:
        def tap(r):
            return x_ref[:, 0, r:r + tm, :]
    else:
        def tap(r):
            return x_ref[:, r:r + tm, :]

    if fold:
        # Fuse the K taps into a single MXU matmul with contraction K*D
        # (non-8-aligned tap offsets only cost an XLU sublane relayout per tap).
        xc = jnp.concatenate([tap(r) for r in rel], axis=-1)          # (BB, TM, K*D)
        xc = xc.reshape(bb * tm, len(rel) * d)
        y = jnp.dot(xc, w_ref[...], preferred_element_type=jnp.float32)
        y = y + b_ref[...]                                            # (1, TN) broadcast
        if relu:
            y = jnp.maximum(y, 0.0)
        o_ref[...] = y.reshape(bb, tm, tn).astype(o_ref.dtype)
    else:
        acc_ref, = scratch                                            # explicit f32 residence
        acc_ref[...] = jnp.broadcast_to(b_ref[...], (bb * tm, tn))
        for k, r in enumerate(rel):                                   # static unrolled taps
            xk = tap(r).reshape(bb * tm, d)
            acc_ref[...] += jnp.dot(xk, w_ref[k],
                                    preferred_element_type=jnp.float32)
        y = acc_ref[...]
        if relu:
            y = jnp.maximum(y, 0.0)
        o_ref[...] = y.reshape(bb, tm, tn).astype(o_ref.dtype)


def tdnn_forward(x, kernel, bias, context, *,
                 block_t=256, block_o=256, block_b=None,
                 use_bf16=True, fold_taps_below=256, halo_mode="element",
                 fuse_relu=False):
    """x: (B, T, D); kernel: (O, D, K); bias: (O,); context: static list of ints."""
    B, T, D = x.shape
    O, D2, K = kernel.shape
    assert D2 == D and K == len(context)

    # --- context validation (OOB on a VMEM ref is silent on TPU — reject bad contexts) ---
    ctx = [int(c) for c in context]
    assert ctx[0] <= ctx[-1], "invalid context"
    assert min(ctx) == ctx[0] and max(ctx) == ctx[-1], \
        "context must start at its min and end at its max"
    start = 0 if ctx[0] >= 0 else -ctx[0]
    end = T if ctx[-1] <= 0 else T - ctx[-1]
    n_valid = end - start
    assert n_valid > 0, "sequence too short for this context"
    offsets = tuple(start + c for c in ctx)                  # absolute row offsets into x
    for off in offsets:
        assert 0 <= off and off + n_valid <= T

    off0 = offsets[0]
    span = offsets[-1] - offsets[0]
    rel = tuple(o - off0 for o in offsets)                   # offsets inside the halo window

    out_dtype = x.dtype
    compute_dtype = jnp.bfloat16 if (use_bf16 and x.dtype == jnp.float32) else x.dtype

    # --- tile sizes ---
    TM = min(_round_up(block_t, 8), _round_up(n_valid, 8))   # time tile (sublane axis)
    n_valid_pad = _round_up(n_valid, TM)
    halo = _round_up(span, 8)                                # keep window 8-aligned
    window = TM + halo

    O_pad = _round_up(O, 128)                                # lane-dense output stores
    TN = min(_round_up(block_o, 128), O_pad)
    O_pad = _round_up(O_pad, TN)

    if block_b is None:                                      # amortize per-grid-step overhead
        block_b = max(1, 128 // TM)
    BB = min(block_b, B)
    B_pad = _round_up(B, BB)

    fold = D < fold_taps_below                               # fuse taps only for small D

    # --- operand prep (pure layout plumbing, stays in XLA) ---
    T_pad = _round_up(max(T, off0 + n_valid_pad + halo), 8)
    x_p = jnp.pad(x, ((0, B_pad - B), (0, T_pad - T), (0, 0))).astype(compute_dtype)
    w = jnp.transpose(kernel, (2, 1, 0))                     # (K, D, O)
    w = jnp.pad(w, ((0, 0), (0, 0), (0, O_pad - O))).astype(compute_dtype)
    if fold:
        w = w.reshape(K * D, O_pad)                          # column k*D+d == tap k, feature d
    b2 = jnp.pad(bias.astype(jnp.float32), (0, O_pad - O)).reshape(1, O_pad)

    gb, gj, gt = B_pad // BB, O_pad // TN, n_valid_pad // TM

    b_spec = pl.BlockSpec((1, TN), lambda b, j, t: (0, j))
    out_spec = pl.BlockSpec((BB, TM, TN), lambda b, j, t: (b, t, j))
    if fold:
        w_spec = pl.BlockSpec((K * D, TN), lambda b, j, t: (0, j))
        scratch = []
    else:
        w_spec = pl.BlockSpec((K, D, TN), lambda b, j, t: (0, 0, j))
        scratch = [pltpu.VMEM((BB * TM, TN), jnp.float32)]

    # VMEM budget: double-buffered x/w/out tiles + f32 accumulator + slack.  Defaults keep
    # this well under 32 MiB so it fits v5e's scoped default and v7x's 64 MiB physical VMEM.
    itm = jnp.dtype(compute_dtype).itemsize
    est = (2 * BB * window * D * itm + 2 * K * D * TN * itm
           + 2 * BB * TM * TN * jnp.dtype(out_dtype).itemsize
           + BB * TM * TN * 4 + (1 << 20))
    vmem_limit = int(min(max(2 * est, 32 << 20), 100 << 20))

    def _run(gather):
        if gather:
            # Blocked fallback: materialize overlapping (window, D) slabs in HBM
            # (duplicates only the halo rows: ~halo/TM extra traffic).
            t_idx = off0 + TM * jnp.arange(gt)[:, None] + jnp.arange(window)[None, :]
            x_in = x_p[:, t_idx, :]                          # (B_pad, gt, window, D)
            x_spec = pl.BlockSpec((BB, 1, window, D), lambda b, j, t: (b, t, 0, 0))
        else:
            # Element-indexed halo: a window of TM+halo rows starting at off0 + t*TM.
            x_in = x_p
            x_spec = pl.BlockSpec((BB, pl.Element(window), D),
                                  lambda b, j, t: (b, off0 + t * TM, 0))
        kfn = functools.partial(_tdnn_kernel, rel=rel, bb=BB, tm=TM, tn=TN, d=D,
                                fold=fold, gather=gather, relu=fuse_relu)
        out = pl.pallas_call(
            kfn,
            out_shape=jax.ShapeDtypeStruct((B_pad, n_valid_pad, O_pad), out_dtype),
            grid=(gb, gj, gt),
            in_specs=[x_spec, w_spec, b_spec],
            out_specs=out_spec,
            scratch_shapes=scratch,
            compiler_params=pltpu.CompilerParams(
                dimension_semantics=("parallel", "parallel", "parallel"),
                vmem_limit_bytes=vmem_limit),
        )(x_in, w, b2)
        return out[:B, :n_valid, :O]

    if halo_mode == "element":
        try:
            return _run(gather=False)
        except Exception:
            # TODO(synk): drop once element-indexed halo BlockSpecs are guaranteed on all
            # deployed Pallas versions; the blocked-gather path is the portable fallback.
            return _run(gather=True)
    return _run(gather=True)


def tdnn_reference(x, kernel, bias, context):
    """Pure-JAX reference matching TDNN.special_convolution."""
    B, T, D = x.shape
    ctx = [int(c) for c in context]
    start = 0 if ctx[0] >= 0 else -ctx[0]
    end = T if ctx[-1] <= 0 else T - ctx[-1]
    n_valid = end - start
    idx = jnp.array([[start + c + cc for cc in ctx] for c in range(n_valid)])
    gathered = x[:, idx, :]                                   # (B, n_valid, K, D)
    out = jnp.einsum('bckd,odk->bco', gathered, kernel,
                     precision=jax.lax.Precision.HIGHEST)
    return out + bias[None, None, :]


# ---------------------------------------------------------------------------
# SelfAttentiveLayer: tanh(x @ ws1.T) @ ws2.T -> softmax over time -> A^T @ x
# ---------------------------------------------------------------------------
def _self_atten_kernel(x_ref, w1_ref, w2_ref, o_ref, a_ref, *, t_valid):
    """x_ref: (1, Tp, Dp); w1_ref: (Dp, Up); w2_ref: (Up, Hp);
    o_ref: (1, Hp, Dp) pooled output; a_ref: (1, Tp, Hp) attention weights."""
    x = x_ref[0]                                                       # (Tp, Dp)
    h = jnp.tanh(jnp.dot(x, w1_ref[...], preferred_element_type=jnp.float32))
    s = jnp.dot(h, w2_ref[...], preferred_element_type=jnp.float32)   # (Tp, Hp)
    # Mask padded time rows so they get exactly zero attention weight.
    row = jax.lax.broadcasted_iota(jnp.int32, s.shape, 0)
    s = jnp.where(row < t_valid, s, -1e30)
    s = s - jnp.max(s, axis=0, keepdims=True)
    p = jnp.exp(s)
    a = p / jnp.sum(p, axis=0, keepdims=True)                          # softmax over time
    a_ref[0] = a.astype(a_ref.dtype)
    pooled = jax.lax.dot_general(a, x, (((0,), (0,)), ((), ())),       # (Hp, Dp) = a^T @ x
                                 preferred_element_type=jnp.float32)
    o_ref[0] = pooled.astype(o_ref.dtype)


def self_attentive_forward(x, ws1, ws2):
    """x: (B, T, Din); ws1: (U, Din); ws2: (H, U) (torch Linear weight layouts).
    Returns (pooled (B, H, Din), A (B, H, T)) — matches SelfAttentiveLayer.forward at eval."""
    B, T, Din = x.shape
    U, Din2 = ws1.shape
    H, U2 = ws2.shape
    assert Din2 == Din and U2 == U

    Tp = _round_up(T, 8)
    Dp = _round_up(Din, 128)
    Up = _round_up(U, 128)
    Hp = _round_up(H, 128)                                   # lane-dense head axis

    x_p = jnp.pad(x.astype(jnp.float32), ((0, 0), (0, Tp - T), (0, Dp - Din)))
    w1 = jnp.pad(ws1.astype(jnp.float32).T, ((0, Dp - Din), (0, Up - U)))
    w2 = jnp.pad(ws2.astype(jnp.float32).T, ((0, Up - U), (0, Hp - H)))

    pooled, attn = pl.pallas_call(
        functools.partial(_self_atten_kernel, t_valid=T),
        out_shape=(jax.ShapeDtypeStruct((B, Hp, Dp), jnp.float32),
                   jax.ShapeDtypeStruct((B, Tp, Hp), jnp.float32)),
        grid=(B,),
        in_specs=[pl.BlockSpec((1, Tp, Dp), lambda b: (b, 0, 0)),
                  pl.BlockSpec((Dp, Up), lambda b: (0, 0)),
                  pl.BlockSpec((Up, Hp), lambda b: (0, 0))],
        out_specs=(pl.BlockSpec((1, Hp, Dp), lambda b: (b, 0, 0)),
                   pl.BlockSpec((1, Tp, Hp), lambda b: (b, 0, 0))),
        compiler_params=pltpu.CompilerParams(dimension_semantics=("parallel",)),
    )(x_p, w1, w2)

    pooled = pooled[:, :H, :Din].astype(x.dtype)
    A = jnp.transpose(attn[:, :T, :H], (0, 2, 1))            # (B, H, T) like the module
    return pooled, A


def self_attentive_reference(x, ws1, ws2):
    h = jnp.tanh(jnp.einsum('btd,ud->btu', x, ws1, precision=jax.lax.Precision.HIGHEST))
    s = jnp.einsum('btu,hu->bth', h, ws2, precision=jax.lax.Precision.HIGHEST)
    a = jax.nn.softmax(s, axis=1)
    A = jnp.transpose(a, (0, 2, 1))
    pooled = jnp.einsum('bht,btd->bhd', A, x, precision=jax.lax.Precision.HIGHEST)
    return pooled, A


# ---------------------------------------------------------------------------
# Full Fusion forward: Pallas kernels for TDNN + attentive pooling, XLA for the
# standard dense layers (plain matmuls the compiler already handles well).
# ---------------------------------------------------------------------------
def _linear(x, w, b=None):
    y = jnp.dot(x, w.T, precision=jax.lax.Precision.HIGHEST)
    return y if b is None else y + b


def _res_block(x, p):
    # TODO(synk): Dropout(p=0.5) is identity at inference; training-mode RNG not implemented.
    h = jax.nn.relu(_linear(x, p["fc1_w"], p["fc1_b"]))
    h = _linear(h, p["fc2_w"], p["fc2_b"])
    return jax.nn.relu(h + x + p["bias"])


def _time_sync_forward(x, p):
    x = jax.nn.relu(_linear(x, p["fc1_w"], p["fc1_b"]))
    x = _res_block(x, p["res1"])
    x = tdnn_forward(x, p["tdnn2_k"], p["tdnn2_b"], [-2, 1], fuse_relu=True)
    x = _res_block(x, p["res2"])
    x = tdnn_forward(x, p["tdnn3_k"], p["tdnn3_b"], [-3, 3], fuse_relu=True)
    x = _res_block(x, p["res3"])
    x = tdnn_forward(x, p["tdnn4_k"], p["tdnn4_b"], [-7, 2], fuse_relu=True)
    x = _res_block(x, p["res4"])
    x = _linear(x, p["bn_frame_w"], p["bn_frame_b"])
    pooled, A = self_attentive_forward(x, p["atten_ws1"], p["atten_ws2"])
    flat = pooled.reshape(pooled.shape[0], -1)
    out = jax.nn.relu(_linear(flat, p["bn_window_w"], p["bn_window_b"]))
    return out, A


def _time_async_forward(y, p):
    B = y.shape[0]
    chunks = y.reshape(B, 7, 768)
    bert = jax.nn.relu(_linear(chunks, p["layer_bert_w"], p["layer_bert_b"]))
    pooled, A = self_attentive_forward(bert, p["ws1"], p["ws2"])
    return pooled.reshape(B, -1), A


def fusion_forward(x, y, params):
    xs, A1 = _time_sync_forward(x, params["b1"])
    ys, A2 = _time_async_forward(y, params["b2"])
    out = jnp.concatenate([xs, ys], axis=1)
    out = jax.nn.relu(_linear(out, params["layer_cat_w"], params["layer_cat_b"]))
    out = _linear(out, params["layer_out_w"])
    return out, A1, A2


# ---------------------------------------------------------------------------
# Parameter construction (deterministic, torch-like layouts / inits)
# ---------------------------------------------------------------------------
def _dense(key, out_dim, in_dim, bias=True):
    scale = 1.0 / math.sqrt(in_dim)
    kw, kb = jax.random.split(key)
    w = scale * jax.random.normal(kw, (out_dim, in_dim), jnp.float32)
    if not bias:
        return w
    b = scale * jax.random.normal(kb, (out_dim,), jnp.float32)
    return w, b


def _res_params(key, dim):
    k1, k2 = jax.random.split(key)
    fc1_w, fc1_b = _dense(k1, dim, dim)
    fc2_w, fc2_b = _dense(k2, dim, dim)
    return {"fc1_w": fc1_w, "fc1_b": fc1_b, "fc2_w": fc2_w, "fc2_b": fc2_b,
            "bias": jnp.ones((dim,), jnp.float32)}


def _tdnn_params(key, dim, kwidth):
    stdv = 1.0 / math.sqrt(dim)
    kk, kb = jax.random.split(key)
    return (stdv * jax.random.normal(kk, (dim, dim, kwidth), jnp.float32),
            stdv * jax.random.normal(kb, (dim,), jnp.float32))


def make_fusion_params(key):
    hidden, input_dim, bert_dim = 512, 500, 768
    atten_in, atten_unit, heads = 128, 128, 5
    ks = iter(jax.random.split(key, 24))
    b1 = {}
    b1["fc1_w"], b1["fc1_b"] = _dense(next(ks), hidden, input_dim)
    b1["res1"] = _res_params(next(ks), hidden)
    b1["tdnn2_k"], b1["tdnn2_b"] = _tdnn_params(next(ks), hidden, 2)
    b1["res2"] = _res_params(next(ks), hidden)
    b1["tdnn3_k"], b1["tdnn3_b"] = _tdnn_params(next(ks), hidden, 2)
    b1["res3"] = _res_params(next(ks), hidden)
    b1["tdnn4_k"], b1["tdnn4_b"] = _tdnn_params(next(ks), hidden, 2)
    b1["res4"] = _res_params(next(ks), hidden)
    b1["bn_frame_w"], b1["bn_frame_b"] = _dense(next(ks), atten_in, hidden)
    b1["atten_ws1"] = 0.1 * jax.random.uniform(next(ks), (atten_unit, atten_in),
                                               jnp.float32, -1.0, 1.0)
    b1["atten_ws2"] = 0.1 * jax.random.uniform(next(ks), (heads, atten_unit),
                                               jnp.float32, -1.0, 1.0)
    b1["bn_window_w"], b1["bn_window_b"] = _dense(next(ks), 128, atten_unit * heads)
    b2 = {}
    b2["layer_bert_w"], b2["layer_bert_b"] = _dense(next(ks), 64, bert_dim)
    b2["ws1"] = 0.1 * jax.random.uniform(next(ks), (64, 64), jnp.float32, -1.0, 1.0)
    b2["ws2"] = 0.1 * jax.random.uniform(next(ks), (heads, 64), jnp.float32, -1.0, 1.0)
    layer_cat_w, layer_cat_b = _dense(next(ks), 128, 128 + 64 * heads)
    layer_out_w = _dense(next(ks), 5, 128, bias=False)
    return {"b1": b1, "b2": b2,
            "layer_cat_w": layer_cat_w, "layer_cat_b": layer_cat_b,
            "layer_out_w": layer_out_w}


if __name__ == "__main__":
    key = jax.random.PRNGKey(0)
    k_tx, k_kern, k_bias, k_attn, k_params, k_x, k_y = jax.random.split(key, 7)

    # --- 1) TDNN kernel unit checks (all three code paths) ---
    batch, seq_len, input_dim, output_dim = 2, 16, 32, 32
    stdv = 1.0 / math.sqrt(input_dim)
    x_small = jax.random.normal(k_tx, (batch, seq_len, input_dim), dtype=jnp.float32)
    bias_small = stdv * jax.random.normal(k_bias, (output_dim,), dtype=jnp.float32)

    checks = [
        ([-2, 0, 2], {}),                      # fused K*D matmul, element-indexed halo
        ([-3, 3], {"fold_taps_below": 0}),     # per-tap dots + f32 VMEM accumulator
        ([1, 3], {"halo_mode": "gather"}),     # blocked-gather halo fallback path
    ]
    for context, extra in checks:
        kwidth = len(context)
        kernel = stdv * jax.random.normal(
            jax.random.fold_in(k_kern, kwidth),
            (output_dim, input_dim, kwidth), dtype=jnp.float32)
        out = jax.block_until_ready(tdnn_forward(x_small, kernel, bias_small, context, **extra))
        # Compare against a reference evaluated on the same bf16-rounded operands.
        xr = x_small.astype(jnp.bfloat16).astype(jnp.float32)
        kr = kernel.astype(jnp.bfloat16).astype(jnp.float32)
        ref = tdnn_reference(xr, kr, bias_small, context)
        assert out.shape == ref.shape, (out.shape, ref.shape)
        assert jnp.allclose(out, ref, atol=2e-3, rtol=2e-3), \
            f"TDNN mismatch vs reference for context={context}"

    # --- 2) SelfAttentiveLayer kernel unit checks (padded heads + masked time) ---
    for (T, Din, U, H) in [(7, 64, 64, 5), (6, 128, 128, 5)]:
        ka, kb_, kc = jax.random.split(jax.random.fold_in(k_attn, T), 3)
        xa = jax.random.normal(ka, (2, T, Din), dtype=jnp.float32)
        ws1 = 0.1 * jax.random.uniform(kb_, (U, Din), jnp.float32, -1.0, 1.0)
        ws2 = 0.1 * jax.random.uniform(kc, (H, U), jnp.float32, -1.0, 1.0)
        pooled, A = jax.block_until_ready(self_attentive_forward(xa, ws1, ws2))
        pooled_ref, A_ref = self_attentive_reference(xa, ws1, ws2)
        assert pooled.shape == pooled_ref.shape and A.shape == A_ref.shape
        assert jnp.allclose(A, A_ref, atol=1e-2, rtol=1e-2), "attention weights mismatch"
        assert jnp.allclose(pooled, pooled_ref, atol=1e-2, rtol=1e-2), "attention pooling mismatch"

    # --- 3) Full Fusion forward (small batch/sequence, module's real widths) ---
    params = make_fusion_params(k_params)
    B, T = 2, 25                                            # T - 3 - 6 - 9 = 7 valid frames
    x = jax.random.normal(k_x, (B, T, 500), dtype=jnp.float32)
    y = jax.random.normal(k_y, (B, 768 * 7), dtype=jnp.float32)
    out, A1, A2 = jax.block_until_ready(fusion_forward(x, y, params))
    assert out.shape == (B, 5), out.shape
    assert A1.shape == (B, 5, T - 18), A1.shape
    assert A2.shape == (B, 5, 7), A2.shape
    for arr in (out, A1, A2):
        assert bool(jnp.all(jnp.isfinite(arr)))
    assert jnp.allclose(A1.sum(-1), 1.0, atol=1e-3)         # softmax-over-time invariants
    assert jnp.allclose(A2.sum(-1), 1.0, atol=1e-3)

    print("KERNEL_OK")
</pallas_src>

<mosaic_0001>
module attributes {stable_mosaic.version = 11 : i64} {
  func.func @_tdnn_kernel(%arg0: i32, %arg1: i32, %arg2: i32, %arg3: memref<2x1x24x32xbf16, #tpu.memory_space<vmem>>, %arg4: memref<96x128xbf16, #tpu.memory_space<vmem>>, %arg5: memref<1x128xf32, #tpu.memory_space<vmem>>, %arg6: memref<2x16x128xf32, #tpu.memory_space<vmem>>) attributes {dimension_semantics = [#tpu.dimension_semantics<parallel>, #tpu.dimension_semantics<parallel>, #tpu.dimension_semantics<parallel>], iteration_bounds = array<i64: 1, 1, 1>, scalar_prefetch = 0 : i64, scratch_operands = 0 : i64, tpu.core_type = #tpu.core_type<tc>, window_params = [{transform_indices = @transform_0, window_bounds = array<i64: 2, 1, 24, 32>}, {transform_indices = @transform_1, window_bounds = array<i64: 96, 128>}, {transform_indices = @transform_2, window_bounds = array<i64: 1, 128>}, {transform_indices = @transform_3, window_bounds = array<i64: 2, 16, 128>}]} {
    %c0 = arith.constant 0 : index
    %c0_0 = arith.constant 0 : index
    %c0_1 = arith.constant 0 : index
    %c0_2 = arith.constant 0 : index
    %0 = vector.load %arg3[%c0, %c0_0, %c0_1, %c0_2] : memref<2x1x24x32xbf16, #tpu.memory_space<vmem>>, vector<2x1x16x32xbf16>
    %1 = vector.shape_cast %0 : vector<2x1x16x32xbf16> to vector<2x16x32xbf16>
    %c0_3 = arith.constant 0 : index
    %c0_4 = arith.constant 0 : index
    %c2 = arith.constant 2 : index
    %c0_5 = arith.constant 0 : index
    %2 = vector.load %arg3[%c0_3, %c0_4, %c2, %c0_5] : memref<2x1x24x32xbf16, #tpu.memory_space<vmem>>, vector<2x1x16x32xbf16>
    %3 = vector.shape_cast %2 : vector<2x1x16x32xbf16> to vector<2x16x32xbf16>
    %c0_6 = arith.constant 0 : index
    %c0_7 = arith.constant 0 : index
    %c4 = arith.constant 4 : index
    %c0_8 = arith.constant 0 : index
    %4 = vector.load %arg3[%c0_6, %c0_7, %c4, %c0_8] : memref<2x1x24x32xbf16, #tpu.memory_space<vmem>>, vector<2x1x16x32xbf16>
    %5 = vector.shape_cast %4 : vector<2x1x16x32xbf16> to vector<2x16x32xbf16>
    %6 = tpu.concatenate %1, %3, %5 in 2 : vector<2x16x32xbf16>, vector<2x16x32xbf16>, vector<2x16x32xbf16> -> vector<2x16x96xbf16>
    %7 = vector.shape_cast %6 : vector<2x16x96xbf16> to vector<32x96xbf16>
    %c0_9 = arith.constant 0 : index
    %c0_10 = arith.constant 0 : index
    %8 = vector.load %arg4[%c0_9, %c0_10] : memref<96x128xbf16, #tpu.memory_space<vmem>>, vector<96x128xbf16>
    %cst = arith.constant dense<0.000000e+00> : vector<32x128xf32>
    %9 = tpu.matmul %7, %8, %cst {dimension_numbers = #tpu.dot_dimension_numbers<[1], [0], [0], [1], [0, 0, 1, 1], [], []>} : vector<32x96xbf16>, vector<96x128xbf16>, vector<32x128xf32> -> vector<32x128xf32>
    %c0_11 = arith.constant 0 : index
    %c0_12 = arith.constant 0 : index
    %10 = vector.load %arg5[%c0_11, %c0_12] : memref<1x128xf32, #tpu.memory_space<vmem>>, vector<1x128xf32>
    %11 = vector.broadcast %10 : vector<1x128xf32> to vector<32x128xf32>
    %12 = arith.addf %9, %11 : vector<32x128xf32>
    %13 = vector.shape_cast %12 : vector<32x128xf32> to vector<2x16x128xf32>
    %c0_13 = arith.constant 0 : index
    %c0_14 = arith.constant 0 : index
    %c0_15 = arith.constant 0 : index
    %14 = vector.load %arg6[%c0_13, %c0_14, %c0_15] : memref<2x16x128xf32, #tpu.memory_space<vmem>>, vector<2x16x128xf32>
    tpu.vector_store %arg6[%c0_13, %c0_14, %c0_15], %13 {strides = array<i32>} : memref<2x16x128xf32, #tpu.memory_space<vmem>>, vector<2x16x128xf32>,
    return
  }
  func.func @transform_0(%arg0: i32, %arg1: i32, %arg2: i32) -> (i32, i32, i32, i32) {
    %c0_i32 = arith.constant 0 : i32
    %c0_i32_0 = arith.constant 0 : i32
    %c0_i32_1 = arith.constant 0 : i32
    return %arg0, %arg2, %c0_i32, %c0_i32_0 : i32, i32, i32, i32
  }
  func.func @transform_1(%arg0: i32, %arg1: i32, %arg2: i32) -> (i32, i32) {
    %c0_i32 = arith.constant 0 : i32
    %c0_i32_0 = arith.constant 0 : i32
    return %c0_i32, %arg1 : i32, i32
  }
  func.func @transform_2(%arg0: i32, %arg1: i32, %arg2: i32) -> (i32, i32) {
    %c0_i32 = arith.constant 0 : i32
    %c0_i32_0 = arith.constant 0 : i32
    return %c0_i32, %arg1 : i32, i32
  }
  func.func @transform_3(%arg0: i32, %arg1: i32, %arg2: i32) -> (i32, i32, i32) {
    %c0_i32 = arith.constant 0 : i32
    return %arg0, %arg2, %arg1 : i32, i32, i32
  }
}

</mosaic_0001>

<llo_original>
// kernel: tpu_custom_call.1
$region0: #{tpu_custom_call.1}
  #allocation0 [shape = 'u32[]', space=smem, size = 0x4, offset = 0x4, fixed_abs, tag = 'smem constant byte address 0x4 - core index']
  #allocation1 [shape = 'u32[144,128]{1,0:T(1,128)}', space=vmem, size = 0x12000, scoped, tag = 'internal scratch']
  %s0 = inlined_call_operand.hbm [shape: bf16[2,1,24,32], index: 0, kind: input, shape index: {}]
  %s1 = inlined_call_operand.hbm [shape: bf16[96,128], index: 1, kind: input, shape index: {}]
  %s2 = inlined_call_operand.vmem [shape: f32[1,128], index: 2, kind: input, shape index: {}]
  %s3 = inlined_call_operand.hbm [shape: f32[2,16,128], index: 3, kind: output, shape index: {}]
  %s4 = sld [smem:[#allocation0]]
  $region30: #{tpu_custom_call.1} parent=0
    _
  %s6 = ssub.s32 1, %s4
  %s7 = scalar_select 0, %s6, %s4
  $region1: #{tpu_custom_call.1} parent=0
    #allocation2 [shape = 'u8[12288]{0}', space=vmem, size = 0x3000, scoped, tag = 'input window, operand 0, single buffered']
    #allocation3 [shape = 's32[1]{0}', space=sflag, size = 0x4, scoped, tag = 'scoped memory for tpu_custom_call.1']
    #allocation4 [shape = 's32[1]{0}', space=sflag, size = 0x4, scoped, tag = 'scoped memory for tpu_custom_call.1']
    #allocation5 [shape = 'u8[24576]{0}', space=vmem, size = 0x6000, scoped, tag = 'input window, operand 1, single buffered']
    #allocation6 [shape = 's32[1]{0}', space=sflag, size = 0x4, scoped, tag = 'scoped memory for tpu_custom_call.1']
    #allocation7 [shape = 'u8[16384]{0}', space=vmem, size = 0x4000, scoped, tag = 'output window, operand 0, single buffered']
    %8 = vsyncpa [#allocation3], 0
    %9 = vsyncpa [#allocation6], 0
    %10 = vsyncpa [#allocation4], 0
    // Predicated region
    $region2: #{tpu_custom_call.1} parent=1 // pred_check
      _
    $region3: #{tpu_custom_call.1} parent=1 // pred_check_branch
      %12 = sbr.rel (0) target = $region5
    $region4: #{tpu_custom_call.1} parent=1 // pred_region
      %s14 = ssub.s32 384, 384
      %15 = vsyncadd [#allocation3], %s14
      %s16 = sshll.u32 [#allocation2], 4
      %s17 = int_to_ptr.vmem [resolvable:$true] %s16
      %22 = dma.hbm_to_vmem [thread:$0]  %s0, 384, %s17, [#allocation3], 64, 64, 4
    $region5: #{tpu_custom_call.1} parent=1 // pred_fallthru
      _
    // Predicated region
    $region6: #{tpu_custom_call.1} parent=1 // pred_check
      _
    $region7: #{tpu_custom_call.1} parent=1 // pred_check_branch
      %24 = sbr.rel (0) target = $region9
    $region8: #{tpu_custom_call.1} parent=1 // pred_region
      %s26 = ssub.s32 768, 768
      %27 = vsyncadd [#allocation6], %s26
      %s28 = sshll.u32 [#allocation5], 4
      %s29 = int_to_ptr.vmem [resolvable:$true] %s28
      %34 = dma.hbm_to_vmem [thread:$0]  %s1, 768, %s29, [#allocation6], 64, 64, 4
    $region9: #{tpu_custom_call.1} parent=1 // pred_fallthru
      _
    // Predicated region
    $region10: #{tpu_custom_call.1} parent=1 // pred_check
      _
    $region11: #{tpu_custom_call.1} parent=1 // pred_check_branch
      %36 = sbr.rel (0) target = $region13
    $region12: #{tpu_custom_call.1} parent=1 // pred_region
      _
    $region13: #{tpu_custom_call.1} parent=1 // pred_fallthru
      _
    // Predicated region
    $region14: #{tpu_custom_call.1} parent=1 // pred_check
      _
    $region15: #{tpu_custom_call.1} parent=1 // pred_check_branch
      %38 = sbr.rel (0) target = $region17
    $region16: #{tpu_custom_call.1} parent=1 // pred_region
      %39 = dma.done [#allocation3], 384
    $region17: #{tpu_custom_call.1} parent=1 // pred_fallthru
      _
    // Predicated region
    $region18: #{tpu_custom_call.1} parent=1 // pred_check
      _
    $region19: #{tpu_custom_call.1} parent=1 // pred_check_branch
      %41 = sbr.rel (0) target = $region21
    $region20: #{tpu_custom_call.1} parent=1 // pred_region
      %42 = dma.done [#allocation6], 768
    $region21: #{tpu_custom_call.1} parent=1 // pred_fallthru
      _
    %v44 = vld [vmem:[#allocation2] sm:$0xf]
    %v45 = vld [vmem:[#allocation2 + $0x4] sm:$0xf]
    %v46 = vld [vmem:[#allocation2 + $0xc] sm:$0xf]
    %v47 = vld [vmem:[#allocation2 + $0x10] sm:$0xf]
    %v48 = vld [vmem:[#allocation2] sm:$0xe]
    %v49 = vld [vmem:[#allocation2 + $0x8] sm:$0x1]
    %v50 = vld [vmem:[#allocation2 + $0xc] sm:$0xe]
    %v51 = vld [vmem:[#allocation2 + $0x14] sm:$0x1]
    %v52 = vld [vmem:[#allocation2] sm:$0xc]
    %v53 = vld [vmem:[#allocation2 + $0x8] sm:$0x3]
    %v54 = vld [vmem:[#allocation2 + $0xc] sm:$0xc]
    %v55 = vld [vmem:[#allocation2 + $0x14] sm:$0x3]
    %v60 = vunpack.c.l.b16 %v44
    %v61 = vunpack.c.l.b16 %v45
    %v62 = vunpack.c.l.b16 %v46
    %v63 = vunpack.c.l.b16 %v47
    %v64 = vpack.c.b16 %v61, %v60
    %v65 = vpack.c.b16 %v63, %v62
    %v70 = vunpack.c.l.b16 %v48
    %v71 = vunpack.c.l.b16 %v49
    %v72 = vunpack.c.l.b16 %v50
    %v73 = vunpack.c.l.b16 %v51
    %v74 = vpack.c.b16 %v61, %v70
    %v75 = vpack.c.b16 %v71, %v71
    %v76 = vpack.c.b16 %v63, %v72
    %v77 = vpack.c.b16 %v73, %v73
    %vm78 = vcmask 1046528
    %v79 = vrot.slane %v74, 1
    %v80 = vrot.slane %v75, 1
    %v81 = vsel %vm78, %v79, %v80
    %v82 = vrot.slane %v76, 1
    %v83 = vrot.slane %v77, 1
    %v84 = vsel %vm78, %v82, %v83
    %85 = vrot.lane.b32.xlu0 %v81, 32
    %v86 = vpop.permute.xlu0 %85
    %87 = vrot.lane.b32.xlu0 %v84, 32
    %v88 = vpop.permute.xlu0 %87
    %v93 = vunpack.c.l.b16 %v52
    %v94 = vunpack.c.l.b16 %v53
    %v95 = vunpack.c.l.b16 %v54
    %v96 = vunpack.c.l.b16 %v55
    %v97 = vpack.c.b16 %v61, %v93
    %v98 = vpack.c.b16 %v94, %v94
    %v99 = vpack.c.b16 %v63, %v95
    %v100 = vpack.c.b16 %v96, %v96
    %vm101 = vcmask 1045504
    %v102 = vrot.slane %v97, 2
    %v103 = vrot.slane %v98, 2
    %v104 = vsel %vm101, %v102, %v103
    %v105 = vrot.slane %v99, 2
    %v106 = vrot.slane %v100, 2
    %v107 = vsel %vm101, %v105, %v106
    %108 = vrot.lane.b32.xlu0 %v104, 64
    %v109 = vpop.permute.xlu0 %108
    %110 = vrot.lane.b32.xlu0 %v107, 64
    %v111 = vpop.permute.xlu0 %110
    %vm112 = vcmask 261120
    %v115 = vsel %vm112, %v64, %v86
    %v118 = vsel %vm112, %v65, %v88
    %vm119 = vcmask 523264
    %v121 = vsel %vm119, %v115, %v109
    %v123 = vsel %vm119, %v118, %v111
    %v124 = vld [vmem:[#allocation5] sm:$0xf]
    %v125 = vld [vmem:[#allocation5 + $0x4] sm:$0xf]
    %v126 = vld [vmem:[#allocation5 + $0x8] sm:$0xf]
    %v127 = vld [vmem:[#allocation5 + $0xc] sm:$0xf]
    %v128 = vld [vmem:[#allocation5 + $0x10] sm:$0xf]
    %v129 = vld [vmem:[#allocation5 + $0x14] sm:$0xf]
    %v130 = vld [vmem:[#allocation5 + $0x18] sm:$0xf]
    %v131 = vld [vmem:[#allocation5 + $0x1c] sm:$0xf]
    %v132 = vld [vmem:[#allocation5 + $0x20] sm:$0xf]
    %v133 = vld [vmem:[#allocation5 + $0x24] sm:$0xf]
    %v134 = vld [vmem:[#allocation5 + $0x28] sm:$0xf]
    %v135 = vld [vmem:[#allocation5 + $0x2c] sm:$0xf]
    %v136 = vld [vmem:[%s2] sm:$0x1]
    %v138 = vlaneseq
    %v139 = vshrl.u32 %v138, 7
    %v140 = vsub.s32 0, %v139
    %v141 = vrot.slane %v136, %v140
    %v155 = vunpack.c.l.b16 %v124
    %v156 = vunpack.c.l.b16 %v125
    %v157 = vunpack.c.l.b16 %v126
    %v158 = vunpack.c.l.b16 %v127
    %v159 = vunpack.c.l.b16 %v128
    %v160 = vunpack.c.l.b16 %v129
    %v161 = vunpack.c.l.b16 %v130
    %v162 = vunpack.c.l.b16 %v131
    %v163 = vunpack.c.l.b16 %v132
    %v164 = vunpack.c.l.b16 %v133
    %v165 = vunpack.c.l.b16 %v134
    %v166 = vunpack.c.l.b16 %v135
    %v167 = vpack.c.b16 %v156, %v155
    %v168 = vpack.c.b16 %v158, %v157
    %v169 = vpack.c.b16 %v160, %v159
    %v170 = vpack.c.b16 %v162, %v161
    %v171 = vpack.c.b16 %v164, %v163
    %v172 = vpack.c.b16 %v166, %v165
    %vm179 = vcmask 785408
    %v180 = vsel %vm179, %v121, 0
    %v182 = vsel %vm179, %v123, 0
    %184 = vmatprep.subr.bf16.mxu0 0
    %185 = vmatpush1.bf16.msra.mxu0 0
    %186 = vmatprep.subr.bf16.mxu0 0
    %187 = vmatpush1.bf16.msra.mxu0 0
    %188 = vmatprep.subr.bf16.mxu0 0
    %189 = vmatpush1.bf16.msra.mxu0 %v172
    %190 = vmatprep.subr.bf16.mxu0 0
    %191 = vmatpush1.bf16.msra.mxu0 %v171
    %192 = vmatprep.subr.bf16.mxu0 0
    %193 = vmatpush1.bf16.msra.mxu0 %v170
    %194 = vmatprep.subr.bf16.mxu0 0
    %195 = vmatpush1.bf16.msra.mxu0 %v169
    %196 = vmatprep.subr.bf16.mxu0 0
    %197 = vmatpush1.bf16.msra.mxu0 %v168
    %198 = vmatprep.subr.bf16.mxu0 0
    %199 = vmatpush1.bf16.msra.mxu0 %v167
    %200 = vmatprep.subr.bf16.mxu0 0
    %201 = vmatpush2.bf16.msra.mxu0 0
    %202 = vmatprep.subr.bf16.mxu0 0
    %203 = vmatpush2.bf16.msra.mxu0 0
    %204 = vmatprep.subr.bf16.mxu0 0
    %205 = vmatpush2.bf16.msra.mxu0 0
    %206 = vmatprep.subr.bf16.mxu0 0
    %207 = vmatpush2.bf16.msra.mxu0 0
    %208 = vmatprep.subr.bf16.mxu0 0
    %209 = vmatpush2.bf16.msra.mxu0 0
    %210 = vmatprep.subr.bf16.mxu0 0
    %211 = vmatpush2.bf16.msra.mxu0 0
    %212 = vmatprep.subr.bf16.mxu0 0
    %213 = vmatpush2.bf16.msra.mxu0 0
    %214 = vmatprep.subr.bf16.mxu0 0
    %215 = vmatpush2.bf16.msra.mxu0 0
    %216 = vmatprep.mubr.bf16.mxu0 0
    %217 = vmatmul.mubr.bf16.gmra.mxu0 %v180
    %v218 = vpop.f32.mrf.mxu0
    %v219 = vadd.f32 %v141, %v218
    %v220 = vpop.f32.mrf.mxu0
    %v221 = vpop.f32.mrf.mxu0
    %v222 = vadd.f32 %v141, %v221
    %v223 = vpop.f32.mrf.mxu0
    %224 = vmatprep.mubr.bf16.mxu0 0
    %225 = vmatmul.mubr.bf16.gmra.mxu0 %v182
    %v226 = vpop.f32.mrf.mxu0
    %v227 = vadd.f32 %v141, %v226
    %v228 = vpop.f32.mrf.mxu0
    %v229 = vpop.f32.mrf.mxu0
    %v230 = vadd.f32 %v141, %v229
    %v231 = vpop.f32.mrf.mxu0
    %232 = vdwg.mxu0
    %233 = vst [vmem:[#allocation7] sm:$0xff] %v219
    %234 = vst [vmem:[#allocation7 + $0x8] sm:$0xff] %v222
    %235 = vst [vmem:[#allocation7 + $0x10] sm:$0xff] %v227
    %236 = vst [vmem:[#allocation7 + $0x18] sm:$0xff] %v230
    // Predicated region
    $region22: #{tpu_custom_call.1} parent=1 // pred_check
      _
    $region23: #{tpu_custom_call.1} parent=1 // pred_check_branch
      %238 = sbr.rel (0) target = $region25
    $region24: #{tpu_custom_call.1} parent=1 // pred_region
      %s240 = ssub.s32 512, 512
      %241 = vsyncadd [#allocation4], %s240
      %s242 = sshll.u32 [#allocation7], 4
      %s243 = int_to_ptr.vmem [resolvable:$true] %s242
      %248 = dma.vmem_to_hbm [thread:$0]  %s243, 512, %s3, [#allocation4], 128, 128, 8
    $region25: #{tpu_custom_call.1} parent=1 // pred_fallthru
      _
    // Predicated region
    $region26: #{tpu_custom_call.1} parent=1 // pred_check
      _
    $region27: #{tpu_custom_call.1} parent=1 // pred_check_branch
      %250 = sbr.rel (0) target = $region29
    $region28: #{tpu_custom_call.1} parent=1 // pred_region
      %251 = dma.done [#allocation4], 512
    $region29: #{tpu_custom_call.1} parent=1 // pred_fallthru
      _
    %252 = vsyncpa [#allocation3], 1
    %253 = vsyncpa [#allocation6], 1
    %254 = vsyncpa [#allocation4], 1

</llo_original>
